<compile_context>
chip_gen: v6e
topology: v6e:2x2x1
jax: 0.10.0
libtpu: 0.0.40
codegen_flags: <defaults>
</compile_context>

<pallas_src>
import jax
import jax.numpy as jnp
from jax.experimental import pallas as pl
from jax.experimental.pallas import tpu as pltpu


def _learnable_pe_kernel(x_ref, pe_ref, o_ref):
    # x_ref : (B, L*D)       lane-dense input (no CLS slot)
    # pe_ref: (1, (L+1)*D)   positional embedding, cls_token pre-folded into slot 0
    # o_ref : (B, (L+1)*D)
    b = x_ref.shape[0]
    d = pe_ref.shape[1] - x_ref.shape[1]          # = d_model (static)
    # CLS slot: batch-broadcast of (cls_token + pe[:, 0, :]).
    o_ref[:, :d] = jnp.broadcast_to(pe_ref[:, :d], (b, d))
    # Body: x + pe for sequence positions 1..L (broadcast over batch/sublane).
    o_ref[:, d:] = x_ref[...] + pe_ref[:, d:]


def init_learnable_pe_params(cls_token, pe):
    """One-time parameter prep (hoisted out of the per-call forward path).

    Folds the batch-invariant CLS add into pe[:, 0, :] and flattens (seq, D)
    into the lane axis.  cls_token / pe are static weights, so this runs once
    at module init, not per forward call.
    """
    _, l_plus_1, d = pe.shape
    assert cls_token.shape == (1, 1, d)
    pe_eff = pe.at[:, 0, :].add(cls_token[:, 0, :])     # (1, L+1, D)
    return pe_eff.reshape(1, l_plus_1 * d)              # (1, (L+1)*D)


def learnable_pe(x, pe_flat):
    """x: (B, L, D); pe_flat: (1, (L+1)*D) from init_learnable_pe_params."""
    b, l, d = x.shape
    n = pe_flat.shape[1]
    assert n == (l + 1) * d

    x_flat = x.reshape(b, l * d)                        # free (bitcast) reshape

    out_flat = pl.pallas_call(
        _learnable_pe_kernel,
        out_shape=jax.ShapeDtypeStruct((b, n), x.dtype),
        in_specs=[
            pl.BlockSpec(memory_space=pltpu.MemorySpace.VMEM),
            pl.BlockSpec(memory_space=pltpu.MemorySpace.VMEM),
        ],
        out_specs=pl.BlockSpec(memory_space=pltpu.MemorySpace.VMEM),
        compiler_params=pltpu.CompilerParams(
            # Let XLA fuse the (trivial) input producers into the custom call
            # instead of emitting standalone fusions.
            allow_input_fusion=[True, True],
        ),
    )(x_flat, pe_flat)

    return out_flat.reshape(b, l + 1, d)


if __name__ == "__main__":
    # Module config: d_model=32, max_len=8, CLS=True -> effective max_len = 9.
    d_model = 32
    max_len = 8
    batch = 2

    key = jax.random.PRNGKey(0)
    kx, kcls, kpe = jax.random.split(key, 3)

    x = jax.random.normal(kx, (batch, max_len, d_model), dtype=jnp.float32)
    # nn.Parameter init in the module is zeros; use small deterministic random
    # values instead so the kernel result is non-trivial (synthetic weights).
    cls_token = 0.01 * jax.random.normal(kcls, (1, 1, d_model), dtype=jnp.float32)
    pe = 0.01 * jax.random.normal(kpe, (1, max_len + 1, d_model), dtype=jnp.float32)

    # One-time parameter prep (would live at module init, not per forward).
    pe_flat = jax.block_until_ready(init_learnable_pe_params(cls_token, pe))

    fwd = jax.jit(learnable_pe)
    out = jax.block_until_ready(fwd(x, pe_flat))

    # Reference (plain JAX, inference-mode dropout == identity).
    cls_b = jnp.broadcast_to(cls_token, (batch, 1, d_model))
    ref = jnp.concatenate([cls_b, x], axis=1) + pe

    assert out.shape == (batch, max_len + 1, d_model)
    assert jnp.allclose(out, ref, atol=1e-6), "mismatch vs reference"
    print("KERNEL_OK")
</pallas_src>

<mosaic_0001>
module attributes {stable_mosaic.version = 11 : i64} {
  func.func @_learnable_pe_kernel(%arg0: memref<2x256xf32, #tpu.memory_space<vmem>>, %arg1: memref<1x288xf32, #tpu.memory_space<vmem>>, %arg2: memref<2x288xf32, #tpu.memory_space<vmem>>) attributes {dimension_semantics = [], scalar_prefetch = 0 : i64, scratch_operands = 0 : i64, tpu.core_type = #tpu.core_type<tc>} {
    %c0 = arith.constant 0 : index
    %c0_0 = arith.constant 0 : index
    %0 = vector.load %arg1[%c0, %c0_0] : memref<1x288xf32, #tpu.memory_space<vmem>>, vector<1x32xf32>
    %1 = vector.shape_cast %0 : vector<1x32xf32> to vector<1x32xf32>
    %2 = vector.broadcast %1 : vector<1x32xf32> to vector<2x32xf32>
    %c0_1 = arith.constant 0 : index
    %c0_2 = arith.constant 0 : index
    %3 = vector.load %arg2[%c0_1, %c0_2] : memref<2x288xf32, #tpu.memory_space<vmem>>, vector<2x32xf32>
    tpu.vector_store %arg2[%c0_1, %c0_2], %2 {strides = array<i32>} : memref<2x288xf32, #tpu.memory_space<vmem>>, vector<2x32xf32>,
    %c0_3 = arith.constant 0 : index
    %c0_4 = arith.constant 0 : index
    %4 = vector.load %arg0[%c0_3, %c0_4] : memref<2x256xf32, #tpu.memory_space<vmem>>, vector<2x256xf32>
    %c0_5 = arith.constant 0 : index
    %c32 = arith.constant 32 : index
    %5 = vector.load %arg1[%c0_5, %c32] : memref<1x288xf32, #tpu.memory_space<vmem>>, vector<1x256xf32>
    %6 = vector.broadcast %5 : vector<1x256xf32> to vector<2x256xf32>
    %7 = arith.addf %4, %6 : vector<2x256xf32>
    %c0_6 = arith.constant 0 : index
    %c32_7 = arith.constant 32 : index
    %8 = vector.load %arg2[%c0_6, %c32_7] : memref<2x288xf32, #tpu.memory_space<vmem>>, vector<2x256xf32>
    tpu.vector_store %arg2[%c0_6, %c32_7], %7 {strides = array<i32>} : memref<2x288xf32, #tpu.memory_space<vmem>>, vector<2x256xf32>,
    return
  }
}

</mosaic_0001>

<llo_original>
// kernel: learnable_pe.1
$region0: #{learnable_pe.1}
  #allocation0 [shape = 'u32[]', space=smem, size = 0x4, offset = 0x4, fixed_abs, tag = 'smem constant byte address 0x4 - core index']
  #allocation1 [shape = 'u32[144,128]{1,0:T(1,128)}', space=vmem, size = 0x12000, scoped, tag = 'internal scratch']
  %s0 = inlined_call_operand.vmem [shape: f32[2,256], index: 0, kind: input, shape index: {}]
  %s1 = inlined_call_operand.vmem [shape: f32[1,288], index: 1, kind: input, shape index: {}]
  %s2 = inlined_call_operand.vmem [shape: f32[2,288], index: 2, kind: output, shape index: {}]
  %s3 = sld [smem:[#allocation0]]
  $region18: #{learnable_pe.1} parent=0
    _
  %s5 = ssub.s32 1, %s3
  %s6 = scalar_select 0, %s5, %s3
  // Predicated region
  $region2: #{learnable_pe.1} parent=0 // pred_check
    _
  $region3: #{learnable_pe.1} parent=0 // pred_check_branch
    %8 = sbr.rel (0) target = $region5
  $region4: #{learnable_pe.1} parent=0 // pred_region
    _
  $region5: #{learnable_pe.1} parent=0 // pred_fallthru
    _
  // Predicated region
  $region6: #{learnable_pe.1} parent=0 // pred_check
    _
  $region7: #{learnable_pe.1} parent=0 // pred_check_branch
    %10 = sbr.rel (0) target = $region9
  $region8: #{learnable_pe.1} parent=0 // pred_region
    _
  $region9: #{learnable_pe.1} parent=0 // pred_fallthru
    _
  %v11 = vld [vmem:[%s1] sm:$0x1]
  %v13 = vlaneseq
  %v14 = vshrl.u32 %v13, 7
  %v15 = vsub.s32 0, %v14
  %v16 = vrot.slane %v11, %v15
  %vm18 = vcmask 254976
  %19 = vst.msk [vmem:[%s2] sm:$0x3] %vm18, %v16
  %v20 = vld [vmem:[%s0] sm:$0xf]
  %v21 = vld [vmem:[%s1] sm:$0x7]
  %v23 = vlaneseq
  %v24 = vshrl.u32 %v23, 7
  %v25 = vsub.s32 0, %v24
  %v26 = vrot.slane %v21, %v25
  %v27 = vlaneseq
  %v28 = vshrl.u32 %v27, 7
  %v29 = vsub.s32 1, %v28
  %v30 = vrot.slane %v21, %v29
  %v31 = vlaneseq
  %v32 = vshrl.u32 %v31, 7
  %v33 = vsub.s32 2, %v32
  %v34 = vrot.slane %v21, %v33
  %v35 = vcombine.low %v26, %v30
  %v37 = vunpack.c.l.s4 1983009808
  %v38 = vunpack.c.0.s8 %v37
  %v39 = vlaneseq
  %v40 = vshrl.u32 %v39, 7
  %v41 = vsub.s32 %v38, %v40
  %v42 = vrot.slane %v35, %v41
  %v44 = vunpack.c.l.s4 1983009808
  %v45 = vunpack.c.0.s8 %v44
  %v46 = vlaneseq
  %v47 = vshrl.u32 %v46, 7
  %v48 = vsub.s32 %v45, %v47
  %v49 = vrot.slane %v34, %v48
  %v50 = vcombine.low %v42, %v49
  %51 = vrot.lane.b32.xlu0 %v50, 96
  %v52 = vpop.permute.xlu0 %51
  %v53 = vrot.slane %v52, 2
  %vm54 = vcmask 785408
  %v55 = vsel %vm54, %v52, %v53
  %v57 = vadd.f32 %v20, %v55
  %59 = vrot.lane.b32.xlu0 %v57, 32
  %v60 = vpop.permute.xlu0 %59
  %v61 = vrot.slane %v60, 6
  %vm62 = vcmask 261120
  %v63 = vsel %vm62, %v61, %v60
  %vm65 = vcmask 1041664
  %vm66 = vcmask 1043458
  %vm67 = vmor %vm66, %vm65
  %vm68 = vcmask 259076
  %vm69 = vmor %vm68, %vm67
  %70 = vst.msk [vmem:[%s2] sm:$0x3f] %vm69, %v63
  // Predicated region
  $region10: #{learnable_pe.1} parent=0 // pred_check
    _
  $region11: #{learnable_pe.1} parent=0 // pred_check_branch
    %72 = sbr.rel (0) target = $region13
  $region12: #{learnable_pe.1} parent=0 // pred_region
    _
  $region13: #{learnable_pe.1} parent=0 // pred_fallthru
    _
  // Predicated region
  $region14: #{learnable_pe.1} parent=0 // pred_check
    _
  $region15: #{learnable_pe.1} parent=0 // pred_check_branch
    %74 = sbr.rel (0) target = $region17
  $region16: #{learnable_pe.1} parent=0 // pred_region
    _
  $region17: #{learnable_pe.1} parent=0 // pred_fallthru
    _

</llo_original>
